<compile_context>
chip_gen: v5e
topology: v5e:2x2
jax: 0.10.0
libtpu: 0.0.40
codegen_flags: <defaults>
</compile_context>

<pallas_src>
import functools

import jax
import jax.numpy as jnp
from jax.experimental import pallas as pl
from jax.experimental.pallas import tpu as pltpu


def _round_up(x, m):
    return ((x + m - 1) // m) * m


def ae_kernel(x_ref, we_ref, wd_ref, enc_ref, dec_ref, *, k):
    # x_ref : [tile, D]   batch tile in the caller's dtype (f32); cast to bf16
    #                     here so HBM only sees a single 4B/elem read of x.
    # we_ref: [D, kp]     encoder weight, transposed, k zero-padded to 128
    # wd_ref: [kp, D]     decoder weight, transposed, k zero-padded to 128
    # enc_ref: [tile, k]  true (unpadded) bottleneck output
    # dec_ref: [tile, D]
    x = x_ref[...].astype(we_ref.dtype)      # VPU cast, hidden under DMA
    enc = jnp.dot(x, we_ref[...], preferred_element_type=jnp.float32)
    dec = jnp.dot(enc.astype(wd_ref.dtype), wd_ref[...],
                  preferred_element_type=jnp.float32)
    # Padded lanes [k:kp] are exact zeros (weights zero-padded); drop them at
    # the store so no separate slice pass over `encoded` is needed outside.
    enc_ref[...] = enc[:, :k].astype(enc_ref.dtype)
    dec_ref[...] = dec.astype(dec_ref.dtype)


def prepare_weights(w_enc, w_dec, *, compute_dtype=jnp.bfloat16):
    """One-time prep (do OUTSIDE the hot loop): transpose to [in, out] layout,
    zero-pad the bottleneck k up to a multiple of 128 (MXU/lane-aligned) and
    cast to the MXU compute dtype."""
    k, d = w_enc.shape
    kp = _round_up(k, 128)
    we_t = jnp.pad(w_enc.T.astype(compute_dtype), ((0, 0), (0, kp - k)))  # [D, kp]
    wd_t = jnp.pad(w_dec.T.astype(compute_dtype), ((0, kp - k), (0, 0)))  # [kp, D]
    return we_t, wd_t


def _pick_tile(n, tile_n):
    """256-aligned batch tile, capped at the (padded) batch size, shrunk until
    the 1-D 'parallel' grid has >= 4 steps when the batch allows it (so both
    v7x TensorCores get >= 2 steps each and the pipeline can hide its
    prologue/epilogue DMA)."""
    tile = min(tile_n, _round_up(n, 256))
    while tile > 256 and pl.cdiv(n, tile) < 4:
        tile //= 2
    return tile


def ae_forward(x, we_t, wd_t, k, *, tile_n=1024, out_dtype=None):
    """x: [N, D] float; we_t/wd_t from prepare_weights(); k: true bottleneck.
    Returns (encoded [N, k], decoded [N, D]) in `out_dtype` (default x.dtype)."""
    N, D = x.shape
    kp = we_t.shape[1]
    out_dtype = x.dtype if out_dtype is None else out_dtype

    tile = _pick_tile(N, tile_n)
    n_pad = _round_up(N, tile)
    if n_pad != N:                      # only pad when the batch needs it
        x = jnp.pad(x, ((0, n_pad - N), (0, 0)))

    bytes_in = (x.size * x.dtype.itemsize
                + we_t.size * we_t.dtype.itemsize
                + wd_t.size * wd_t.dtype.itemsize)
    bytes_out = (n_pad * k + n_pad * D) * jnp.dtype(out_dtype).itemsize
    cost = pl.CostEstimate(
        flops=4 * n_pad * D * kp,          # two matmuls, 2*N*D*kp each
        transcendentals=0,
        bytes_accessed=bytes_in + bytes_out,
    )

    enc, dec = pl.pallas_call(
        functools.partial(ae_kernel, k=k),
        out_shape=(
            jax.ShapeDtypeStruct((n_pad, k), out_dtype),
            jax.ShapeDtypeStruct((n_pad, D), out_dtype),
        ),
        grid_spec=pltpu.PrefetchScalarGridSpec(
            num_scalar_prefetch=0,
            grid=(n_pad // tile,),
            in_specs=[
                pl.BlockSpec((tile, D), lambda i: (i, 0)),
                # Constant index_map: the weight blocks (~128 KiB total) are
                # DMA'd once and stay VMEM-resident across the batch grid.
                pl.BlockSpec((D, kp), lambda i: (0, 0)),
                pl.BlockSpec((kp, D), lambda i: (0, 0)),
            ],
            out_specs=[
                pl.BlockSpec((tile, k), lambda i: (i, 0)),
                pl.BlockSpec((tile, D), lambda i: (i, 0)),
            ],
        ),
        compiler_params=pltpu.CompilerParams(
            dimension_semantics=("parallel",),
        ),
        cost_estimate=cost,
    )(x, we_t, wd_t)

    if n_pad != N:                      # only slice when padding was added
        enc = enc[:N]
        dec = dec[:N]
    return enc, dec


if __name__ == "__main__":
    # Shapes consistent with the module: D = flatten_data.shape[1], k = 81.
    N, D, k = 1024, 256, 81

    key = jax.random.PRNGKey(0)
    kx, ke, kd = jax.random.split(key, 3)

    # Data, centered like `flatten_data - mean_data` in the reference script.
    x = jax.random.normal(kx, (N, D), dtype=jnp.float32)
    x = x - x.mean(axis=0, keepdims=True)

    # nn.Linear(bias=False) default init: U(-1/sqrt(fan_in), +1/sqrt(fan_in)).
    w_enc = jax.random.uniform(ke, (k, D), minval=-1.0, maxval=1.0,
                               dtype=jnp.float32) / jnp.sqrt(D)
    w_dec = jax.random.uniform(kd, (D, k), minval=-1.0, maxval=1.0,
                               dtype=jnp.float32) / jnp.sqrt(k)

    # One-time weight prep (transpose + pad k->128 + bf16 cast), outside jit.
    we_t, wd_t = prepare_weights(w_enc, w_dec)

    fwd = jax.jit(functools.partial(ae_forward, k=k))
    encoded, decoded = fwd(x, we_t, wd_t)
    jax.block_until_ready((encoded, decoded))

    # Reference (PyTorch forward semantics) in plain f32 JAX.
    enc_ref = x @ w_enc.T
    dec_ref = enc_ref @ w_dec.T

    assert encoded.shape == (N, k) and decoded.shape == (N, D)
    # bf16 MXU inputs + f32 accumulation: ~0.4% relative rounding expected.
    assert jnp.allclose(encoded, enc_ref, atol=3e-2, rtol=3e-2), (
        float(jnp.max(jnp.abs(encoded - enc_ref))))
    assert jnp.allclose(decoded, dec_ref, atol=3e-2, rtol=3e-2), (
        float(jnp.max(jnp.abs(decoded - dec_ref))))

    print("KERNEL_OK")
</pallas_src>

<mosaic_0001>
module attributes {stable_mosaic.version = 11 : i64} {
  func.func @ae_kernel(%arg0: i32, %arg1: memref<256x256xf32, #tpu.memory_space<vmem>>, %arg2: memref<256x128xbf16, #tpu.memory_space<vmem>>, %arg3: memref<128x256xbf16, #tpu.memory_space<vmem>>, %arg4: memref<256x81xf32, #tpu.memory_space<vmem>>, %arg5: memref<256x256xf32, #tpu.memory_space<vmem>>) attributes {dimension_semantics = [#tpu.dimension_semantics<parallel>], iteration_bounds = array<i64: 4>, scalar_prefetch = 0 : i64, scratch_operands = 0 : i64, tpu.core_type = #tpu.core_type<tc>, window_params = [{transform_indices = @transform_0, window_bounds = array<i64: 256, 256>}, {pipeline_mode = #tpu.pipeline_mode<synchronous>, transform_indices = @transform_1, window_bounds = array<i64: 256, 128>}, {pipeline_mode = #tpu.pipeline_mode<synchronous>, transform_indices = @transform_2, window_bounds = array<i64: 128, 256>}, {transform_indices = @transform_3, window_bounds = array<i64: 256, 81>}, {transform_indices = @transform_4, window_bounds = array<i64: 256, 256>}]} {
    %c0 = arith.constant 0 : index
    %c0_0 = arith.constant 0 : index
    %0 = vector.load %arg1[%c0, %c0_0] : memref<256x256xf32, #tpu.memory_space<vmem>>, vector<256x256xf32>
    %1 = arith.truncf %0 : vector<256x256xf32> to vector<256x256xbf16>
    %c0_1 = arith.constant 0 : index
    %c0_2 = arith.constant 0 : index
    %2 = vector.load %arg2[%c0_1, %c0_2] : memref<256x128xbf16, #tpu.memory_space<vmem>>, vector<256x128xbf16>
    %cst = arith.constant dense<0.000000e+00> : vector<256x128xf32>
    %3 = tpu.matmul %1, %2, %cst {dimension_numbers = #tpu.dot_dimension_numbers<[1], [0], [0], [1], [0, 0, 1, 1], [], []>} : vector<256x256xbf16>, vector<256x128xbf16>, vector<256x128xf32> -> vector<256x128xf32>
    %4 = arith.truncf %3 : vector<256x128xf32> to vector<256x128xbf16>
    %c0_3 = arith.constant 0 : index
    %c0_4 = arith.constant 0 : index
    %5 = vector.load %arg3[%c0_3, %c0_4] : memref<128x256xbf16, #tpu.memory_space<vmem>>, vector<128x256xbf16>
    %cst_5 = arith.constant dense<0.000000e+00> : vector<256x256xf32>
    %6 = tpu.matmul %4, %5, %cst_5 {dimension_numbers = #tpu.dot_dimension_numbers<[1], [0], [0], [1], [0, 0, 1, 1], [], []>} : vector<256x128xbf16>, vector<128x256xbf16>, vector<256x256xf32> -> vector<256x256xf32>
    %7 = vector.extract_strided_slice %3 {offsets = [0, 0], sizes = [256, 81], strides = [1, 1]} : vector<256x128xf32> to vector<256x81xf32>
    %c0_6 = arith.constant 0 : index
    %c0_7 = arith.constant 0 : index
    %8 = vector.load %arg4[%c0_6, %c0_7] : memref<256x81xf32, #tpu.memory_space<vmem>>, vector<256x81xf32>
    tpu.vector_store %arg4[%c0_6, %c0_7], %7 {strides = array<i32>} : memref<256x81xf32, #tpu.memory_space<vmem>>, vector<256x81xf32>,
    %c0_8 = arith.constant 0 : index
    %c0_9 = arith.constant 0 : index
    %9 = vector.load %arg5[%c0_8, %c0_9] : memref<256x256xf32, #tpu.memory_space<vmem>>, vector<256x256xf32>
    tpu.vector_store %arg5[%c0_8, %c0_9], %6 {strides = array<i32>} : memref<256x256xf32, #tpu.memory_space<vmem>>, vector<256x256xf32>,
    return
  }
  func.func @transform_0(%arg0: i32) -> (i32, i32) {
    %c0_i32 = arith.constant 0 : i32
    %c0_i32_0 = arith.constant 0 : i32
    return %arg0, %c0_i32 : i32, i32
  }
  func.func @transform_1(%arg0: i32) -> (i32, i32) {
    %c0_i32 = arith.constant 0 : i32
    %c0_i32_0 = arith.constant 0 : i32
    %c0_i32_1 = arith.constant 0 : i32
    return %c0_i32, %c0_i32_0 : i32, i32
  }
  func.func @transform_2(%arg0: i32) -> (i32, i32) {
    %c0_i32 = arith.constant 0 : i32
    %c0_i32_0 = arith.constant 0 : i32
    %c0_i32_1 = arith.constant 0 : i32
    return %c0_i32, %c0_i32_0 : i32, i32
  }
  func.func @transform_3(%arg0: i32) -> (i32, i32) {
    %c0_i32 = arith.constant 0 : i32
    %c0_i32_0 = arith.constant 0 : i32
    return %arg0, %c0_i32 : i32, i32
  }
  func.func @transform_4(%arg0: i32) -> (i32, i32) {
    %c0_i32 = arith.constant 0 : i32
    %c0_i32_0 = arith.constant 0 : i32
    return %arg0, %c0_i32 : i32, i32
  }
}

</mosaic_0001>

<llo_original>
// kernel: ae_forward.1
$region0: #{ae_forward.1}
  #allocation0 [shape = 'u32[]', space=smem, size = 0x4, offset = 0x4, fixed_abs, tag = 'smem constant byte address 0x4 - core index']
  #allocation1 [shape = 'u32[72,128]{1,0:T(1,128)}', space=vmem, size = 0x9000, scoped, tag = 'internal scratch']
  %s0 = inlined_call_operand.hbm [shape: f32[1024,256], index: 0, kind: input, shape index: {}]
  %s1 = inlined_call_operand.hbm [shape: bf16[256,128], index: 1, kind: input, shape index: {}]
  %s2 = inlined_call_operand.hbm [shape: bf16[128,256], index: 2, kind: input, shape index: {}]
  %s3 = inlined_call_operand.vmem [shape: f32[1024,81], index: 3, kind: output, shape index: {0}]
  %s4 = inlined_call_operand.hbm [shape: f32[1024,256], index: 4, kind: output, shape index: {1}]
  %5 = xla_tuple %s3, %s4
  %s6 = sld [smem:[#allocation0]]
  $region65: #{ae_forward.1} parent=0
    _
  %s8 = ssub.s32 1, %s6
  %s9 = scalar_select 0, %s8, %s6
  $region1: #{ae_forward.1} parent=0
    #allocation2 [shape = 'u8[524288]{0}', space=vmem, size = 0x80000, scoped, tag = 'input window, operand 0']
    #allocation3 [shape = 's32[2]{0}', space=sflag, size = 0x8, scoped, tag = 'scoped memory for ae_forward.1']
    #allocation4 [shape = 's32[2]{0}', space=sflag, size = 0x8, scoped, tag = 'scoped memory for ae_forward.1']
    #allocation5 [shape = 'u8[65536]{0}', space=vmem, size = 0x10000, scoped, tag = 'input window, operand 1, single buffered']
    #allocation6 [shape = 's32[1]{0}', space=sflag, size = 0x4, scoped, tag = 'scoped memory for ae_forward.1']
    #allocation7 [shape = 'u8[65536]{0}', space=vmem, size = 0x10000, scoped, tag = 'input window, operand 2, single buffered']
    #allocation8 [shape = 'u8[524288]{0}', space=vmem, size = 0x80000, scoped, tag = 'output window, operand 1']
    %10 = vsyncpa [#allocation3], 0
    %s11 = scalar_lea.sflag [#allocation3], 1
    %12 = vsyncpa %s11, 0
    %13 = vsyncpa [#allocation6], 0
    %14 = vsyncpa [#allocation4], 0
    %s15 = scalar_lea.sflag [#allocation4], 1
    %16 = vsyncpa %s15, 0
    loop: start=0, step=1, limit=6
    $region2: #{ae_forward.1} parent=1 // loop_pre_header
      _
    $region3: #{ae_forward.1} parent=1 // loop_header
      %s18 = sphi 0, %s22
      %p19 = scmp.ge.s32.totalorder %s18, 6
      %s28 = sphi 0, %s30
      %s31 = sphi 0, %s28
      %s32 = sphi 0, %s31
      %s48 = sphi 0, %s32
      %s52 = sphi 0, %s52
      %s54 = sphi 0, %s52
      %s55 = sphi 0, %s54
      %s69 = sphi 0, %s55
      %s73 = sphi 0, %s73
      %s75 = sphi 0, %s73
      %s76 = sphi 0, %s75
      %s90 = sphi 0, %s76
      %s96 = sphi 0, %s98
      %s99 = sphi 0, %s96
      %s100 = sphi 0, %s99
      %s116 = sphi 0, %s100
      %s122 = sphi 0, %s124
      %s125 = sphi 0, %s122
      %s126 = sphi 0, %s125
      %s142 = sphi 0, %s126
    $region4: #{ae_forward.1} parent=1 // loop_header_branch
      %21 = sbr.rel (%p19) target = $region8
    $region5: #{ae_forward.1} parent=1 // loop_body
      %s23 = ssub.s32 %s18, 1
      %s24 = ssub.s32 %s18, 2
      %s25 = sadd.s32 %s18, 1
      %s26 = ssub.s32 %s18, %s25
      %p27 = scmp.eq.s32.totalorder %s26, 0
      %s29 = sadd.s32 %s28, 1
      %s30 = scalar_select %p27, %s28, %s29
      %p33 = pneg %p27
      %p34 = scmp.eq.s32.totalorder %s18, 3
      %p35 = por %p33, %p34
      %p36 = scmp.ne.s32.totalorder %s28, %s31
      %p37 = scmp.eq.s32.totalorder %s18, 0
      %p38 = por %p36, %p37
      %p39 = scmp.ne.s32.totalorder %s28, %s31
      %p40 = scmp.eq.s32.totalorder %s23, 3
      %p41 = por %p39, %p40
      %p42 = scmp.ne.s32.totalorder %s31, %s32
      %p43 = scmp.eq.s32.totalorder %s23, 0
      %p44 = por %p42, %p43
      %p45 = scmp.ne.s32.totalorder %s31, %s32
      %p46 = scmp.eq.s32.totalorder %s24, 3
      %p47 = por %p45, %p46
      %p49 = scmp.ne.s32.totalorder %s32, %s48
      %p50 = scmp.eq.s32.totalorder %s24, 0
      %p51 = por %p49, %p50
      %s53 = sadd.s32 %s52, 1
      %p56 = scmp.eq.s32.totalorder %s18, 3
      %p57 = scmp.ne.s32.totalorder %s52, %s54
      %p58 = scmp.eq.s32.totalorder %s18, 0
      %p59 = por %p57, %p58
      %p60 = scmp.ne.s32.totalorder %s52, %s54
      %p61 = scmp.eq.s32.totalorder %s23, 3
      %p62 = por %p60, %p61
      %p63 = scmp.ne.s32.totalorder %s54, %s55
      %p64 = scmp.eq.s32.totalorder %s23, 0
      %p65 = por %p63, %p64
      %p66 = scmp.ne.s32.totalorder %s54, %s55
      %p67 = scmp.eq.s32.totalorder %s24, 3
      %p68 = por %p66, %p67
      %p70 = scmp.ne.s32.totalorder %s55, %s69
      %p71 = scmp.eq.s32.totalorder %s24, 0
      %p72 = por %p70, %p71
      %s74 = sadd.s32 %s73, 1
      %p77 = scmp.eq.s32.totalorder %s18, 3
      %p78 = scmp.ne.s32.totalorder %s73, %s75
      %p79 = scmp.eq.s32.totalorder %s18, 0
      %p80 = por %p78, %p79
      %p81 = scmp.ne.s32.totalorder %s73, %s75
      %p82 = scmp.eq.s32.totalorder %s23, 3
      %p83 = por %p81, %p82
      %p84 = scmp.ne.s32.totalorder %s75, %s76
      %p85 = scmp.eq.s32.totalorder %s23, 0
      %p86 = por %p84, %p85
      %p87 = scmp.ne.s32.totalorder %s75, %s76
      %p88 = scmp.eq.s32.totalorder %s24, 3
      %p89 = por %p87, %p88
      %p91 = scmp.ne.s32.totalorder %s76, %s90
      %p92 = scmp.eq.s32.totalorder %s24, 0
      %p93 = por %p91, %p92
      %s94 = ssub.s32 %s18, %s25
      %p95 = scmp.eq.s32.totalorder %s94, 0
      %s97 = sadd.s32 %s96, 1
      %s98 = scalar_select %p95, %s96, %s97
      %p101 = pneg %p95
      %p102 = scmp.eq.s32.totalorder %s18, 3
      %p103 = por %p101, %p102
      %p104 = scmp.ne.s32.totalorder %s96, %s99
      %p105 = scmp.eq.s32.totalorder %s18, 0
      %p106 = por %p104, %p105
      %p107 = scmp.ne.s32.totalorder %s96, %s99
      %p108 = scmp.eq.s32.totalorder %s23, 3
      %p109 = por %p107, %p108
      %p110 = scmp.ne.s32.totalorder %s99, %s100
      %p111 = scmp.eq.s32.totalorder %s23, 0
      %p112 = por %p110, %p111
      %p113 = scmp.ne.s32.totalorder %s99, %s100
      %p114 = scmp.eq.s32.totalorder %s24, 3
      %p115 = por %p113, %p114
      %p117 = scmp.ne.s32.totalorder %s100, %s116
      %p118 = scmp.eq.s32.totalorder %s24, 0
      %p119 = por %p117, %p118
      %s120 = ssub.s32 %s18, %s25
      %p121 = scmp.eq.s32.totalorder %s120, 0
      %s123 = sadd.s32 %s122, 1
      %s124 = scalar_select %p121, %s122, %s123
      %p127 = pneg %p121
      %p128 = scmp.eq.s32.totalorder %s18, 3
      %p129 = por %p127, %p128
      %p130 = scmp.ne.s32.totalorder %s122, %s125
      %p131 = scmp.eq.s32.totalorder %s18, 0
      %p132 = por %p130, %p131
      %p133 = scmp.ne.s32.totalorder %s122, %s125
      %p134 = scmp.eq.s32.totalorder %s23, 3
      %p135 = por %p133, %p134
      %p136 = scmp.ne.s32.totalorder %s125, %s126
      %p137 = scmp.eq.s32.totalorder %s23, 0
      %p138 = por %p136, %p137
      %p139 = scmp.ne.s32.totalorder %s125, %s126
      %p140 = scmp.eq.s32.totalorder %s24, 3
      %p141 = por %p139, %p140
      %p143 = scmp.ne.s32.totalorder %s126, %s142
      %p144 = scmp.eq.s32.totalorder %s24, 0
      %p145 = por %p143, %p144
      %p146 = scmp.le.s32.totalorder 1, %s18
      %p147 = scmp.lt.s32.totalorder %s18, 5
      %p148 = pnand %p146, %p147
      %p149 = pneg %p148
      // Predicated region
      $region9: #{ae_forward.1} parent=5 // pred_check
        _
      $region10: #{ae_forward.1} parent=5 // pred_check_branch
        %151 = sbr.rel (%p148) target = $region12
      $region11: #{ae_forward.1} parent=5 // pred_region
        %s152 = ssub.s32 %s18, 1
        // Predicated region
        $region13: #{ae_forward.1} parent=11 // pred_check
          %p153 = pneg %p65
        $region14: #{ae_forward.1} parent=11 // pred_check_branch
          %155 = sbr.rel (%p153) target = $region16
        $region15: #{ae_forward.1} parent=11 // pred_region
          %157 = vsyncadd [#allocation6], 0
          %s158 = sshll.u32 %s1, 4
          %s159 = int_to_ptr.hbm [resolvable:$true] %s158
          %s160 = sshll.u32 [#allocation5], 4
          %s161 = int_to_ptr.vmem [resolvable:$true] %s160
          %166 = dma.hbm_to_vmem [thread:$0]  %s159, 2048, %s161, [#allocation6], 64, 64, 4
        $region16: #{ae_forward.1} parent=11 // pred_fallthru
          _
        // Predicated region
        $region17: #{ae_forward.1} parent=11 // pred_check
          %p167 = pneg %p86
        $region18: #{ae_forward.1} parent=11 // pred_check_branch
          %169 = sbr.rel (%p167) target = $region20
        $region19: #{ae_forward.1} parent=11 // pred_region
          %171 = vsyncadd [#allocation6], 0
          %s172 = sshll.u32 %s2, 4
          %s173 = int_to_ptr.hbm [resolvable:$true] %s172
          %s174 = sshll.u32 [#allocation7], 4
          %s175 = int_to_ptr.vmem [resolvable:$true] %s174
          %180 = dma.hbm_to_vmem [thread:$0]  %s173, 2048, %s175, [#allocation6], 128, 128, 8
        $region20: #{ae_forward.1} parent=11 // pred_fallthru
          _
      $region12: #{ae_forward.1} parent=5 // pred_fallthru
        _
      %p181 = scmp.lt.s32.totalorder %s18, 4
      // Predicated region
      $region21: #{ae_forward.1} parent=5 // pred_check
        %p182 = pneg %p181
      $region22: #{ae_forward.1} parent=5 // pred_check_branch
        %184 = sbr.rel (%p182) target = $region24
      $region23: #{ae_forward.1} parent=5 // pred_region
        // Predicated region
        $region25: #{ae_forward.1} parent=23 // pred_check
          %p185 = pneg %p38
        $region26: #{ae_forward.1} parent=23 // pred_check_branch
          %187 = sbr.rel (%p185) target = $region28
        $region27: #{ae_forward.1} parent=23 // pred_region
          %s188 = sand.u32 %s28, 1
          %s189 = scalar_lea.sflag [#allocation3], %s188
          %s190 = sand.u32 %s28, 1
          %s191 = smul.addr %s190, 512
          %s192 = scalar_lea.vmem [#allocation2], %s191
          %s193 = smul.u32 32, %s18
          %195 = vsyncadd %s189, 0
          %s196 = smul.addr %s193, 2
          %s197 = smul.addr %s196, 8
          %s198 = scalar_lea.hbm %s0, %s197
          %s199 = sshll.u32 %s198, 4
          %s200 = int_to_ptr.hbm [resolvable:$true] %s199
          %s201 = sshll.u32 %s192, 4
          %s202 = int_to_ptr.vmem [resolvable:$true] %s201
          %207 = dma.hbm_to_vmem [thread:$0]  %s200, 8192, %s202, %s189, 256, 256, 16
        $region28: #{ae_forward.1} parent=23 // pred_fallthru
          _
      $region24: #{ae_forward.1} parent=5 // pred_fallthru
        _
      %p208 = scmp.le.s32.totalorder 1, %s18
      %p209 = scmp.lt.s32.totalorder %s18, 5
      %p210 = pnand %p208, %p209
      %p211 = pneg %p210
      // Predicated region
      $region29: #{ae_forward.1} parent=5 // pred_check
        _
      $region30: #{ae_forward.1} parent=5 // pred_check_branch
        %213 = sbr.rel (%p210) target = $region32
      $region31: #{ae_forward.1} parent=5 // pred_region
        %s214 = ssub.s32 %s18, 1
        %s215 = sand.u32 %s31, 1
        %s216 = scalar_lea.sflag [#allocation3], %s215
        %s217 = sand.u32 %s31, 1
        %s218 = smul.addr %s217, 512
        %s219 = scalar_lea.vmem [#allocation2], %s218
        // Predicated region
        $region33: #{ae_forward.1} parent=31 // pred_check
          %p220 = pneg %p44
        $region34: #{ae_forward.1} parent=31 // pred_check_branch
          %222 = sbr.rel (%p220) target = $region36
        $region35: #{ae_forward.1} parent=31 // pred_region
          %224 = dma.done %s216, 8192
        $region36: #{ae_forward.1} parent=31 // pred_fallthru
          _
        // Predicated region
        $region37: #{ae_forward.1} parent=31 // pred_check
          %p225 = pneg %p65
        $region38: #{ae_forward.1} parent=31 // pred_check_branch
          %227 = sbr.rel (%p225) target = $region40
        $region39: #{ae_forward.1} parent=31 // pred_region
          %229 = dma.done [#allocation6], 2048
        $region40: #{ae_forward.1} parent=31 // pred_fallthru
          _
        // Predicated region
        $region41: #{ae_forward.1} parent=31 // pred_check
          %p230 = pneg %p86
        $region42: #{ae_forward.1} parent=31 // pred_check_branch
          %232 = sbr.rel (%p230) target = $region44
        $region43: #{ae_forward.1} parent=31 // pred_region
          %234 = dma.done [#allocation6], 2048
        $region44: #{ae_forward.1} parent=31 // pred_fallthru
          _
        %s235 = sand.u32 %s31, 1
        %s236 = scalar_lea.sflag [#allocation3], %s235
        %s237 = sand.u32 %s31, 1
        %s238 = smul.addr %s237, 512
        %s239 = scalar_lea.vmem [#allocation2], %s238
        %p240 = pneg %p44
        %p241 = pneg %p41
        %p242 = pneg %p65
        %p243 = pneg %p62
        %p244 = pneg %p86
        %p245 = pneg %p83
        %p246 = pneg %p112
        %p247 = pneg %p109
        %s248 = smul.u32 32, %s23
        %p249 = scmp.lt.s32.totalorder %s248, 127
        %s250 = scalar_select %p249, %s248, 127
        %s251 = smul.addr %s250, 8
        %s252 = scalar_lea.vmem %s3, %s251
        %p253 = pneg %p138
        %p254 = pneg %p135
        %s255 = sand.u32 %s125, 1
        %s256 = scalar_lea.sflag [#allocation4], %s255
        %s257 = sand.u32 %s125, 1
        %s258 = smul.addr %s257, 512
        %s259 = scalar_lea.vmem [#allocation8], %s258
        %s260 = smul.u32 32, %s23
        %s261 = smul.u32 32, %s23
        %p262 = scmp.lt.s32.totalorder %s261, 127
        %s263 = scalar_select %p262, %s261, 127
        %s264 = smul.addr %s263, 8
        %s265 = scalar_lea.vmem %s3, %s264
        %s266 = smul.u32 32, %s23
        %s267 = smul.u32 32, %s23
        %v268 = vld [vmem:[%s219] sm:$0xff]
        %v269 = vld [vmem:[%s219 + $0x8] sm:$0xff]
        %v270 = vld [vmem:[%s219 + $0x10] sm:$0xff]
        %v271 = vld [vmem:[%s219 + $0x18] sm:$0xff]
        %v272 = vld [vmem:[%s219 + $0x20] sm:$0xff]
        %v273 = vld [vmem:[%s219 + $0x28] sm:$0xff]
        %v274 = vld [vmem:[%s219 + $0x30] sm:$0xff]
        %v275 = vld [vmem:[%s219 + $0x38] sm:$0xff]
        %v276 = vld [vmem:[%s219 + $0x40] sm:$0xff]
        %v277 = vld [vmem:[%s219 + $0x48] sm:$0xff]
        %v278 = vld [vmem:[%s219 + $0x50] sm:$0xff]
        %v279 = vld [vmem:[%s219 + $0x58] sm:$0xff]
        %v280 = vld [vmem:[%s219 + $0x60] sm:$0xff]
        %v281 = vld [vmem:[%s219 + $0x68] sm:$0xff]
        %v282 = vld [vmem:[%s219 + $0x70] sm:$0xff]
        %v283 = vld [vmem:[%s219 + $0x78] sm:$0xff]
        %v284 = vld [vmem:[%s219 + $0x80] sm:$0xff]
        %v285 = vld [vmem:[%s219 + $0x88] sm:$0xff]
        %v286 = vld [vmem:[%s219 + $0x90] sm:$0xff]
        %v287 = vld [vmem:[%s219 + $0x98] sm:$0xff]
        %v288 = vld [vmem:[%s219 + $0xa0] sm:$0xff]
        %v289 = vld [vmem:[%s219 + $0xa8] sm:$0xff]
        %v290 = vld [vmem:[%s219 + $0xb0] sm:$0xff]
        %v291 = vld [vmem:[%s219 + $0xb8] sm:$0xff]
        %v292 = vld [vmem:[%s219 + $0xc0] sm:$0xff]
        %v293 = vld [vmem:[%s219 + $0xc8] sm:$0xff]
        %v294 = vld [vmem:[%s219 + $0xd0] sm:$0xff]
        %v295 = vld [vmem:[%s219 + $0xd8] sm:$0xff]
        %v296 = vld [vmem:[%s219 + $0xe0] sm:$0xff]
        %v297 = vld [vmem:[%s219 + $0xe8] sm:$0xff]
        %v298 = vld [vmem:[%s219 + $0xf0] sm:$0xff]
        %v299 = vld [vmem:[%s219 + $0xf8] sm:$0xff]
        %v300 = vld [vmem:[%s219 + $0x100] sm:$0xff]
        %v301 = vld [vmem:[%s219 + $0x108] sm:$0xff]
        %v302 = vld [vmem:[%s219 + $0x110] sm:$0xff]
        %v303 = vld [vmem:[%s219 + $0x118] sm:$0xff]
        %v304 = vld [vmem:[%s219 + $0x120] sm:$0xff]
        %v305 = vld [vmem:[%s219 + $0x128] sm:$0xff]
        %v306 = vld [vmem:[%s219 + $0x130] sm:$0xff]
        %v307 = vld [vmem:[%s219 + $0x138] sm:$0xff]
        %v308 = vld [vmem:[%s219 + $0x140] sm:$0xff]
        %v309 = vld [vmem:[%s219 + $0x148] sm:$0xff]
        %v310 = vld [vmem:[%s219 + $0x150] sm:$0xff]
        %v311 = vld [vmem:[%s219 + $0x158] sm:$0xff]
        %v312 = vld [vmem:[%s219 + $0x160] sm:$0xff]
        %v313 = vld [vmem:[%s219 + $0x168] sm:$0xff]
        %v314 = vld [vmem:[%s219 + $0x170] sm:$0xff]
        %v315 = vld [vmem:[%s219 + $0x178] sm:$0xff]
        %v316 = vld [vmem:[%s219 + $0x180] sm:$0xff]
        %v317 = vld [vmem:[%s219 + $0x188] sm:$0xff]
        %v318 = vld [vmem:[%s219 + $0x190] sm:$0xff]
        %v319 = vld [vmem:[%s219 + $0x198] sm:$0xff]
        %v320 = vld [vmem:[%s219 + $0x1a0] sm:$0xff]
        %v321 = vld [vmem:[%s219 + $0x1a8] sm:$0xff]
        %v322 = vld [vmem:[%s219 + $0x1b0] sm:$0xff]
        %v323 = vld [vmem:[%s219 + $0x1b8] sm:$0xff]
        %v324 = vld [vmem:[%s219 + $0x1c0] sm:$0xff]
        %v325 = vld [vmem:[%s219 + $0x1c8] sm:$0xff]
        %v326 = vld [vmem:[%s219 + $0x1d0] sm:$0xff]
        %v327 = vld [vmem:[%s219 + $0x1d8] sm:$0xff]
        %v328 = vld [vmem:[%s219 + $0x1e0] sm:$0xff]
        %v329 = vld [vmem:[%s219 + $0x1e8] sm:$0xff]
        %v330 = vld [vmem:[%s219 + $0x1f0] sm:$0xff]
        %v331 = vld [vmem:[%s219 + $0x1f8] sm:$0xff]
        %v332 = vpack.c.bf16 %v270, %v268
        %v333 = vpack.c.bf16 %v271, %v269
        %v334 = vpack.c.bf16 %v274, %v272
        %v335 = vpack.c.bf16 %v275, %v273
        %v336 = vpack.c.bf16 %v278, %v276
        %v337 = vpack.c.bf16 %v279, %v277
        %v338 = vpack.c.bf16 %v282, %v280
        %v339 = vpack.c.bf16 %v283, %v281
        %v340 = vpack.c.bf16 %v286, %v284
        %v341 = vpack.c.bf16 %v287, %v285
        %v342 = vpack.c.bf16 %v290, %v288
        %v343 = vpack.c.bf16 %v291, %v289
        %v344 = vpack.c.bf16 %v294, %v292
        %v345 = vpack.c.bf16 %v295, %v293
        %v346 = vpack.c.bf16 %v298, %v296
        %v347 = vpack.c.bf16 %v299, %v297
        %v348 = vpack.c.bf16 %v302, %v300
        %v349 = vpack.c.bf16 %v303, %v301
        %v350 = vpack.c.bf16 %v306, %v304
        %v351 = vpack.c.bf16 %v307, %v305
        %v352 = vpack.c.bf16 %v310, %v308
        %v353 = vpack.c.bf16 %v311, %v309
        %v354 = vpack.c.bf16 %v314, %v312
        %v355 = vpack.c.bf16 %v315, %v313
        %v356 = vpack.c.bf16 %v318, %v316
        %v357 = vpack.c.bf16 %v319, %v317
        %v358 = vpack.c.bf16 %v322, %v320
        %v359 = vpack.c.bf16 %v323, %v321
        %v360 = vpack.c.bf16 %v326, %v324
        %v361 = vpack.c.bf16 %v327, %v325
        %v362 = vpack.c.bf16 %v330, %v328
        %v363 = vpack.c.bf16 %v331, %v329
        %v364 = vld [vmem:[#allocation5] sm:$0xf]
        %v365 = vld [vmem:[#allocation5 + $0x4] sm:$0xf]
        %v366 = vld [vmem:[#allocation5 + $0x8] sm:$0xf]
        %v367 = vld [vmem:[#allocation5 + $0xc] sm:$0xf]
        %v368 = vld [vmem:[#allocation5 + $0x10] sm:$0xf]
        %v369 = vld [vmem:[#allocation5 + $0x14] sm:$0xf]
        %v370 = vld [vmem:[#allocation5 + $0x18] sm:$0xf]
        %v371 = vld [vmem:[#allocation5 + $0x1c] sm:$0xf]
        %v372 = vld [vmem:[#allocation5 + $0x20] sm:$0xf]
        %v373 = vld [vmem:[#allocation5 + $0x24] sm:$0xf]
        %v374 = vld [vmem:[#allocation5 + $0x28] sm:$0xf]
        %v375 = vld [vmem:[#allocation5 + $0x2c] sm:$0xf]
        %v376 = vld [vmem:[#allocation5 + $0x30] sm:$0xf]
        %v377 = vld [vmem:[#allocation5 + $0x34] sm:$0xf]
        %v378 = vld [vmem:[#allocation5 + $0x38] sm:$0xf]
        %v379 = vld [vmem:[#allocation5 + $0x3c] sm:$0xf]
        %v380 = vld [vmem:[#allocation5 + $0x40] sm:$0xf]
        %v381 = vld [vmem:[#allocation5 + $0x44] sm:$0xf]
        %v382 = vld [vmem:[#allocation5 + $0x48] sm:$0xf]
        %v383 = vld [vmem:[#allocation5 + $0x4c] sm:$0xf]
        %v384 = vld [vmem:[#allocation5 + $0x50] sm:$0xf]
        %v385 = vld [vmem:[#allocation5 + $0x54] sm:$0xf]
        %v386 = vld [vmem:[#allocation5 + $0x58] sm:$0xf]
        %v387 = vld [vmem:[#allocation5 + $0x5c] sm:$0xf]
        %v388 = vld [vmem:[#allocation5 + $0x60] sm:$0xf]
        %v389 = vld [vmem:[#allocation5 + $0x64] sm:$0xf]
        %v390 = vld [vmem:[#allocation5 + $0x68] sm:$0xf]
        %v391 = vld [vmem:[#allocation5 + $0x6c] sm:$0xf]
        %v392 = vld [vmem:[#allocation5 + $0x70] sm:$0xf]
        %v393 = vld [vmem:[#allocation5 + $0x74] sm:$0xf]
        %v394 = vld [vmem:[#allocation5 + $0x78] sm:$0xf]
        %v395 = vld [vmem:[#allocation5 + $0x7c] sm:$0xf]
        %v428 = vunpack.c.l.b16 %v364
        %v429 = vunpack.c.l.b16 %v365
        %v430 = vunpack.c.l.b16 %v366
        %v431 = vunpack.c.l.b16 %v367
        %v432 = vunpack.c.l.b16 %v368
        %v433 = vunpack.c.l.b16 %v369
        %v434 = vunpack.c.l.b16 %v370
        %v435 = vunpack.c.l.b16 %v371
        %v436 = vunpack.c.l.b16 %v372
        %v437 = vunpack.c.l.b16 %v373
        %v438 = vunpack.c.l.b16 %v374
        %v439 = vunpack.c.l.b16 %v375
        %v440 = vunpack.c.l.b16 %v376
        %v441 = vunpack.c.l.b16 %v377
        %v442 = vunpack.c.l.b16 %v378
        %v443 = vunpack.c.l.b16 %v379
        %v444 = vunpack.c.l.b16 %v380
        %v445 = vunpack.c.l.b16 %v381
        %v446 = vunpack.c.l.b16 %v382
        %v447 = vunpack.c.l.b16 %v383
        %v448 = vunpack.c.l.b16 %v384
        %v449 = vunpack.c.l.b16 %v385
        %v450 = vunpack.c.l.b16 %v386
        %v451 = vunpack.c.l.b16 %v387
        %v452 = vunpack.c.l.b16 %v388
        %v453 = vunpack.c.l.b16 %v389
        %v454 = vunpack.c.l.b16 %v390
        %v455 = vunpack.c.l.b16 %v391
        %v456 = vunpack.c.l.b16 %v392
        %v457 = vunpack.c.l.b16 %v393
        %v458 = vunpack.c.l.b16 %v394
        %v459 = vunpack.c.l.b16 %v395
        %v460 = vpack.c.b16 %v429, %v428
        %v461 = vpack.c.b16 %v431, %v430
        %v462 = vpack.c.b16 %v433, %v432
        %v463 = vpack.c.b16 %v435, %v434
        %v464 = vpack.c.b16 %v437, %v436
        %v465 = vpack.c.b16 %v439, %v438
        %v466 = vpack.c.b16 %v441, %v440
        %v467 = vpack.c.b16 %v443, %v442
        %v468 = vpack.c.b16 %v445, %v444
        %v469 = vpack.c.b16 %v447, %v446
        %v470 = vpack.c.b16 %v449, %v448
        %v471 = vpack.c.b16 %v451, %v450
        %v472 = vpack.c.b16 %v453, %v452
        %v473 = vpack.c.b16 %v455, %v454
        %v474 = vpack.c.b16 %v457, %v456
        %v475 = vpack.c.b16 %v459, %v458
        %492 = vmatpush.bf16.msra.mxu0 %v467
        %493 = vmatpush.bf16.msra.mxu0 %v466
        %494 = vmatpush.bf16.msra.mxu0 %v465
        %495 = vmatpush.bf16.msra.mxu0 %v464
        %496 = vmatpush.bf16.msra.mxu0 %v463
        %497 = vmatpush.bf16.msra.mxu0 %v462
        %498 = vmatpush.bf16.msra.mxu0 %v461
        %499 = vmatpush.bf16.msra.mxu0 %v460
        %500 = vmatmul.bf16.gmra.mxu0 %v332
        %v501 = vpop.f32.mrf.mxu0
        %v502 = vadd.f32 0.0, %v501
        %v503 = vpop.f32.mrf.mxu0
        %v504 = vadd.f32 0.0, %v503
        %505 = vmatmul.bf16.gmra.mxu0 %v334
        %v506 = vpop.f32.mrf.mxu0
        %v507 = vadd.f32 0.0, %v506
        %v508 = vpop.f32.mrf.mxu0
        %v509 = vadd.f32 0.0, %v508
        %510 = vmatmul.bf16.gmra.mxu0 %v336
        %v511 = vpop.f32.mrf.mxu0
        %v512 = vadd.f32 0.0, %v511
        %v513 = vpop.f32.mrf.mxu0
        %v514 = vadd.f32 0.0, %v513
        %515 = vmatmul.bf16.gmra.mxu0 %v338
        %v516 = vpop.f32.mrf.mxu0
        %v517 = vadd.f32 0.0, %v516
        %v518 = vpop.f32.mrf.mxu0
        %v519 = vadd.f32 0.0, %v518
        %520 = vmatmul.bf16.gmra.mxu0 %v340
        %v521 = vpop.f32.mrf.mxu0
        %v522 = vadd.f32 0.0, %v521
        %v523 = vpop.f32.mrf.mxu0
        %v524 = vadd.f32 0.0, %v523
        %525 = vmatmul.bf16.gmra.mxu0 %v342
        %v526 = vpop.f32.mrf.mxu0
        %v527 = vadd.f32 0.0, %v526
        %v528 = vpop.f32.mrf.mxu0
        %v529 = vadd.f32 0.0, %v528
        %530 = vmatmul.bf16.gmra.mxu0 %v344
        %v531 = vpop.f32.mrf.mxu0
        %v532 = vadd.f32 0.0, %v531
        %v533 = vpop.f32.mrf.mxu0
        %v534 = vadd.f32 0.0, %v533
        %535 = vmatmul.bf16.gmra.mxu0 %v346
        %v536 = vpop.f32.mrf.mxu0
        %v537 = vadd.f32 0.0, %v536
        %v538 = vpop.f32.mrf.mxu0
        %v539 = vadd.f32 0.0, %v538
        %540 = vmatmul.bf16.gmra.mxu0 %v348
        %v541 = vpop.f32.mrf.mxu0
        %v542 = vadd.f32 0.0, %v541
        %v543 = vpop.f32.mrf.mxu0
        %v544 = vadd.f32 0.0, %v543
        %545 = vmatmul.bf16.gmra.mxu0 %v350
        %v546 = vpop.f32.mrf.mxu0
        %v547 = vadd.f32 0.0, %v546
        %v548 = vpop.f32.mrf.mxu0
        %v549 = vadd.f32 0.0, %v548
        %550 = vmatmul.bf16.gmra.mxu0 %v352
        %v551 = vpop.f32.mrf.mxu0
        %v552 = vadd.f32 0.0, %v551
        %v553 = vpop.f32.mrf.mxu0
        %v554 = vadd.f32 0.0, %v553
        %555 = vmatmul.bf16.gmra.mxu0 %v354
        %v556 = vpop.f32.mrf.mxu0
        %v557 = vadd.f32 0.0, %v556
        %v558 = vpop.f32.mrf.mxu0
        %v559 = vadd.f32 0.0, %v558
        %560 = vmatmul.bf16.gmra.mxu0 %v356
        %v561 = vpop.f32.mrf.mxu0
        %v562 = vadd.f32 0.0, %v561
        %v563 = vpop.f32.mrf.mxu0
        %v564 = vadd.f32 0.0, %v563
        %565 = vmatmul.bf16.gmra.mxu0 %v358
        %v566 = vpop.f32.mrf.mxu0
        %v567 = vadd.f32 0.0, %v566
        %v568 = vpop.f32.mrf.mxu0
        %v569 = vadd.f32 0.0, %v568
        %570 = vmatmul.bf16.gmra.mxu0 %v360
        %v571 = vpop.f32.mrf.mxu0
        %v572 = vadd.f32 0.0, %v571
        %v573 = vpop.f32.mrf.mxu0
        %v574 = vadd.f32 0.0, %v573
        %575 = vmatmul.bf16.gmra.mxu0 %v362
        %v576 = vpop.f32.mrf.mxu0
        %v577 = vadd.f32 0.0, %v576
        %v578 = vpop.f32.mrf.mxu0
        %v579 = vadd.f32 0.0, %v578
        %580 = vdwg.mxu0
        %581 = vmatpush.bf16.msra.mxu0 %v475
        %582 = vmatpush.bf16.msra.mxu0 %v474
        %583 = vmatpush.bf16.msra.mxu0 %v473
        %584 = vmatpush.bf16.msra.mxu0 %v472
        %585 = vmatpush.bf16.msra.mxu0 %v471
        %586 = vmatpush.bf16.msra.mxu0 %v470
        %587 = vmatpush.bf16.msra.mxu0 %v469
        %588 = vmatpush.bf16.msra.mxu0 %v468
        %589 = vmatmul.bf16.gmra.mxu0 %v333
        %v590 = vpop.f32.mrf.mxu0
        %v591 = vadd.f32 %v502, %v590
        %v592 = vpop.f32.mrf.mxu0
        %v593 = vadd.f32 %v504, %v592
        %594 = vmatmul.bf16.gmra.mxu0 %v335
        %v595 = vpop.f32.mrf.mxu0
        %v596 = vadd.f32 %v507, %v595
        %v597 = vpop.f32.mrf.mxu0
        %v598 = vadd.f32 %v509, %v597
        %599 = vmatmul.bf16.gmra.mxu0 %v337
        %v600 = vpop.f32.mrf.mxu0
        %v601 = vadd.f32 %v512, %v600
        %v602 = vpop.f32.mrf.mxu0
        %v603 = vadd.f32 %v514, %v602
        %604 = vmatmul.bf16.gmra.mxu0 %v339
        %v605 = vpop.f32.mrf.mxu0
        %v606 = vadd.f32 %v517, %v605
        %v607 = vpop.f32.mrf.mxu0
        %v608 = vadd.f32 %v519, %v607
        %609 = vmatmul.bf16.gmra.mxu0 %v341
        %v610 = vpop.f32.mrf.mxu0
        %v611 = vadd.f32 %v522, %v610
        %v612 = vpop.f32.mrf.mxu0
        %v613 = vadd.f32 %v524, %v612
        %614 = vmatmul.bf16.gmra.mxu0 %v343
        %v615 = vpop.f32.mrf.mxu0
        %v616 = vadd.f32 %v527, %v615
        %v617 = vpop.f32.mrf.mxu0
        %v618 = vadd.f32 %v529, %v617
        %619 = vmatmul.bf16.gmra.mxu0 %v345
        %v620 = vpop.f32.mrf.mxu0
        %v621 = vadd.f32 %v532, %v620
        %v622 = vpop.f32.mrf.mxu0
        %v623 = vadd.f32 %v534, %v622
        %624 = vmatmul.bf16.gmra.mxu0 %v347
        %v625 = vpop.f32.mrf.mxu0
        %v626 = vadd.f32 %v537, %v625
        %v627 = vpop.f32.mrf.mxu0
        %v628 = vadd.f32 %v539, %v627
        %629 = vmatmul.bf16.gmra.mxu0 %v349
        %v630 = vpop.f32.mrf.mxu0
        %v631 = vadd.f32 %v542, %v630
        %v632 = vpop.f32.mrf.mxu0
        %v633 = vadd.f32 %v544, %v632
        %634 = vmatmul.bf16.gmra.mxu0 %v351
        %v635 = vpop.f32.mrf.mxu0
        %v636 = vadd.f32 %v547, %v635
        %v637 = vpop.f32.mrf.mxu0
        %v638 = vadd.f32 %v549, %v637
        %639 = vmatmul.bf16.gmra.mxu0 %v353
        %v640 = vpop.f32.mrf.mxu0
        %v641 = vadd.f32 %v552, %v640
        %v642 = vpop.f32.mrf.mxu0
        %v643 = vadd.f32 %v554, %v642
        %644 = vmatmul.bf16.gmra.mxu0 %v355
        %v645 = vpop.f32.mrf.mxu0
        %v646 = vadd.f32 %v557, %v645
        %v647 = vpop.f32.mrf.mxu0
        %v648 = vadd.f32 %v559, %v647
        %649 = vmatmul.bf16.gmra.mxu0 %v357
        %v650 = vpop.f32.mrf.mxu0
        %v651 = vadd.f32 %v562, %v650
        %v652 = vpop.f32.mrf.mxu0
        %v653 = vadd.f32 %v564, %v652
        %654 = vmatmul.bf16.gmra.mxu0 %v359
        %v655 = vpop.f32.mrf.mxu0
        %v656 = vadd.f32 %v567, %v655
        %v657 = vpop.f32.mrf.mxu0
        %v658 = vadd.f32 %v569, %v657
        %659 = vmatmul.bf16.gmra.mxu0 %v361
        %v660 = vpop.f32.mrf.mxu0
        %v661 = vadd.f32 %v572, %v660
        %v662 = vpop.f32.mrf.mxu0
        %v663 = vadd.f32 %v574, %v662
        %664 = vmatmul.bf16.gmra.mxu0 %v363
        %v665 = vpop.f32.mrf.mxu0
        %v666 = vadd.f32 %v577, %v665
        %v667 = vpop.f32.mrf.mxu0
        %v668 = vadd.f32 %v579, %v667
        %669 = vdwg.mxu0
        %v670 = vpack.c.bf16 %v593, %v591
        %v671 = vpack.c.bf16 %v598, %v596
        %v672 = vpack.c.bf16 %v603, %v601
        %v673 = vpack.c.bf16 %v608, %v606
        %v674 = vpack.c.bf16 %v613, %v611
        %v675 = vpack.c.bf16 %v618, %v616
        %v676 = vpack.c.bf16 %v623, %v621
        %v677 = vpack.c.bf16 %v628, %v626
        %v678 = vpack.c.bf16 %v633, %v631
        %v679 = vpack.c.bf16 %v638, %v636
        %v680 = vpack.c.bf16 %v643, %v641
        %v681 = vpack.c.bf16 %v648, %v646
        %v682 = vpack.c.bf16 %v653, %v651
        %v683 = vpack.c.bf16 %v658, %v656
        %v684 = vpack.c.bf16 %v663, %v661
        %v685 = vpack.c.bf16 %v668, %v666
        %v686 = vld [vmem:[#allocation7] sm:$0xff]
        %v687 = vld [vmem:[#allocation7 + $0x8] sm:$0xff]
        %v688 = vld [vmem:[#allocation7 + $0x10] sm:$0xff]
        %v689 = vld [vmem:[#allocation7 + $0x18] sm:$0xff]
        %v690 = vld [vmem:[#allocation7 + $0x20] sm:$0xff]
        %v691 = vld [vmem:[#allocation7 + $0x28] sm:$0xff]
        %v692 = vld [vmem:[#allocation7 + $0x30] sm:$0xff]
        %v693 = vld [vmem:[#allocation7 + $0x38] sm:$0xff]
        %v694 = vld [vmem:[#allocation7 + $0x40] sm:$0xff]
        %v695 = vld [vmem:[#allocation7 + $0x48] sm:$0xff]
        %v696 = vld [vmem:[#allocation7 + $0x50] sm:$0xff]
        %v697 = vld [vmem:[#allocation7 + $0x58] sm:$0xff]
        %v698 = vld [vmem:[#allocation7 + $0x60] sm:$0xff]
        %v699 = vld [vmem:[#allocation7 + $0x68] sm:$0xff]
        %v700 = vld [vmem:[#allocation7 + $0x70] sm:$0xff]
        %v701 = vld [vmem:[#allocation7 + $0x78] sm:$0xff]
        %v718 = vunpack.c.l.b16 %v686
        %v719 = vunpack.c.h.b16 %v686
        %v720 = vunpack.c.l.b16 %v687
        %v721 = vunpack.c.h.b16 %v687
        %v722 = vunpack.c.l.b16 %v688
        %v723 = vunpack.c.h.b16 %v688
        %v724 = vunpack.c.l.b16 %v689
        %v725 = vunpack.c.h.b16 %v689
        %v726 = vunpack.c.l.b16 %v690
        %v727 = vunpack.c.h.b16 %v690
        %v728 = vunpack.c.l.b16 %v691
        %v729 = vunpack.c.h.b16 %v691
        %v730 = vunpack.c.l.b16 %v692
        %v731 = vunpack.c.h.b16 %v692
        %v732 = vunpack.c.l.b16 %v693
        %v733 = vunpack.c.h.b16 %v693
        %v734 = vunpack.c.l.b16 %v694
        %v735 = vunpack.c.h.b16 %v694
        %v736 = vunpack.c.l.b16 %v695
        %v737 = vunpack.c.h.b16 %v695
        %v738 = vunpack.c.l.b16 %v696
        %v739 = vunpack.c.h.b16 %v696
        %v740 = vunpack.c.l.b16 %v697
        %v741 = vunpack.c.h.b16 %v697
        %v742 = vunpack.c.l.b16 %v698
        %v743 = vunpack.c.h.b16 %v698
        %v744 = vunpack.c.l.b16 %v699
        %v745 = vunpack.c.h.b16 %v699
        %v746 = vunpack.c.l.b16 %v700
        %v747 = vunpack.c.h.b16 %v700
        %v748 = vunpack.c.l.b16 %v701
        %v749 = vunpack.c.h.b16 %v701
        %v750 = vpack.c.b16 %v720, %v718
        %v751 = vpack.c.b16 %v721, %v719
        %v752 = vpack.c.b16 %v724, %v722
        %v753 = vpack.c.b16 %v725, %v723
        %v754 = vpack.c.b16 %v728, %v726
        %v755 = vpack.c.b16 %v729, %v727
        %v756 = vpack.c.b16 %v732, %v730
        %v757 = vpack.c.b16 %v733, %v731
        %v758 = vpack.c.b16 %v736, %v734
        %v759 = vpack.c.b16 %v737, %v735
        %v760 = vpack.c.b16 %v740, %v738
        %v761 = vpack.c.b16 %v741, %v739
        %v762 = vpack.c.b16 %v744, %v742
        %v763 = vpack.c.b16 %v745, %v743
        %v764 = vpack.c.b16 %v748, %v746
        %v765 = vpack.c.b16 %v749, %v747
        %782 = vmatpush.bf16.msra.mxu0 %v764
        %783 = vmatpush.bf16.msra.mxu0 %v762
        %784 = vmatpush.bf16.msra.mxu0 %v760
        %785 = vmatpush.bf16.msra.mxu0 %v758
        %786 = vmatpush.bf16.msra.mxu0 %v756
        %787 = vmatpush.bf16.msra.mxu0 %v754
        %788 = vmatpush.bf16.msra.mxu0 %v752
        %789 = vmatpush.bf16.msra.mxu0 %v750
        %790 = vmatmul.bf16.gmra.mxu0 %v670
        %v791 = vpop.f32.mrf.mxu0
        %v792 = vadd.f32 0.0, %v791
        %v793 = vpop.f32.mrf.mxu0
        %v794 = vadd.f32 0.0, %v793
        %795 = vmatmul.bf16.gmra.mxu0 %v671
        %v796 = vpop.f32.mrf.mxu0
        %v797 = vadd.f32 0.0, %v796
        %v798 = vpop.f32.mrf.mxu0
        %v799 = vadd.f32 0.0, %v798
        %800 = vmatmul.bf16.gmra.mxu0 %v672
        %v801 = vpop.f32.mrf.mxu0
        %v802 = vadd.f32 0.0, %v801
        %v803 = vpop.f32.mrf.mxu0
        %v804 = vadd.f32 0.0, %v803
        %805 = vmatmul.bf16.gmra.mxu0 %v673
        %v806 = vpop.f32.mrf.mxu0
        %v807 = vadd.f32 0.0, %v806
        %v808 = vpop.f32.mrf.mxu0
        %v809 = vadd.f32 0.0, %v808
        %810 = vmatmul.bf16.gmra.mxu0 %v674
        %v811 = vpop.f32.mrf.mxu0
        %v812 = vadd.f32 0.0, %v811
        %v813 = vpop.f32.mrf.mxu0
        %v814 = vadd.f32 0.0, %v813
        %815 = vmatmul.bf16.gmra.mxu0 %v675
        %v816 = vpop.f32.mrf.mxu0
        %v817 = vadd.f32 0.0, %v816
        %v818 = vpop.f32.mrf.mxu0
        %v819 = vadd.f32 0.0, %v818
        %820 = vmatmul.bf16.gmra.mxu0 %v676
        %v821 = vpop.f32.mrf.mxu0
        %v822 = vadd.f32 0.0, %v821
        %v823 = vpop.f32.mrf.mxu0
        %v824 = vadd.f32 0.0, %v823
        %825 = vmatmul.bf16.gmra.mxu0 %v677
        %v826 = vpop.f32.mrf.mxu0
        %v827 = vadd.f32 0.0, %v826
        %v828 = vpop.f32.mrf.mxu0
        %v829 = vadd.f32 0.0, %v828
        %830 = vmatmul.bf16.gmra.mxu0 %v678
        %v831 = vpop.f32.mrf.mxu0
        %v832 = vadd.f32 0.0, %v831
        %v833 = vpop.f32.mrf.mxu0
        %v834 = vadd.f32 0.0, %v833
        %835 = vmatmul.bf16.gmra.mxu0 %v679
        %v836 = vpop.f32.mrf.mxu0
        %v837 = vadd.f32 0.0, %v836
        %v838 = vpop.f32.mrf.mxu0
        %v839 = vadd.f32 0.0, %v838
        %840 = vmatmul.bf16.gmra.mxu0 %v680
        %v841 = vpop.f32.mrf.mxu0
        %v842 = vadd.f32 0.0, %v841
        %v843 = vpop.f32.mrf.mxu0
        %v844 = vadd.f32 0.0, %v843
        %845 = vmatmul.bf16.gmra.mxu0 %v681
        %v846 = vpop.f32.mrf.mxu0
        %v847 = vadd.f32 0.0, %v846
        %v848 = vpop.f32.mrf.mxu0
        %v849 = vadd.f32 0.0, %v848
        %850 = vmatmul.bf16.gmra.mxu0 %v682
        %v851 = vpop.f32.mrf.mxu0
        %v852 = vadd.f32 0.0, %v851
        %v853 = vpop.f32.mrf.mxu0
        %v854 = vadd.f32 0.0, %v853
        %855 = vmatmul.bf16.gmra.mxu0 %v683
        %v856 = vpop.f32.mrf.mxu0
        %v857 = vadd.f32 0.0, %v856
        %v858 = vpop.f32.mrf.mxu0
        %v859 = vadd.f32 0.0, %v858
        %860 = vmatmul.bf16.gmra.mxu0 %v684
        %v861 = vpop.f32.mrf.mxu0
        %v862 = vadd.f32 0.0, %v861
        %v863 = vpop.f32.mrf.mxu0
        %v864 = vadd.f32 0.0, %v863
        %865 = vmatmul.bf16.gmra.mxu0 %v685
        %v866 = vpop.f32.mrf.mxu0
        %v867 = vadd.f32 0.0, %v866
        %v868 = vpop.f32.mrf.mxu0
        %v869 = vadd.f32 0.0, %v868
        %870 = vdwg.mxu0
        %871 = vmatpush.bf16.msra.mxu0 %v765
        %872 = vmatpush.bf16.msra.mxu0 %v763
        %873 = vmatpush.bf16.msra.mxu0 %v761
        %874 = vmatpush.bf16.msra.mxu0 %v759
        %875 = vmatpush.bf16.msra.mxu0 %v757
        %876 = vmatpush.bf16.msra.mxu0 %v755
        %877 = vmatpush.bf16.msra.mxu0 %v753
        %878 = vmatpush.bf16.msra.mxu0 %v751
        %879 = vmatmul.bf16.gmra.mxu0 %v670
        %v880 = vpop.f32.mrf.mxu0
        %v881 = vadd.f32 0.0, %v880
        %v882 = vpop.f32.mrf.mxu0
        %v883 = vadd.f32 0.0, %v882
        %884 = vmatmul.bf16.gmra.mxu0 %v671
        %v885 = vpop.f32.mrf.mxu0
        %v886 = vadd.f32 0.0, %v885
        %v887 = vpop.f32.mrf.mxu0
        %v888 = vadd.f32 0.0, %v887
        %889 = vmatmul.bf16.gmra.mxu0 %v672
        %v890 = vpop.f32.mrf.mxu0
        %v891 = vadd.f32 0.0, %v890
        %v892 = vpop.f32.mrf.mxu0
        %v893 = vadd.f32 0.0, %v892
        %894 = vmatmul.bf16.gmra.mxu0 %v673
        %v895 = vpop.f32.mrf.mxu0
        %v896 = vadd.f32 0.0, %v895
        %v897 = vpop.f32.mrf.mxu0
        %v898 = vadd.f32 0.0, %v897
        %899 = vmatmul.bf16.gmra.mxu0 %v674
        %v900 = vpop.f32.mrf.mxu0
        %v901 = vadd.f32 0.0, %v900
        %v902 = vpop.f32.mrf.mxu0
        %v903 = vadd.f32 0.0, %v902
        %904 = vmatmul.bf16.gmra.mxu0 %v675
        %v905 = vpop.f32.mrf.mxu0
        %v906 = vadd.f32 0.0, %v905
        %v907 = vpop.f32.mrf.mxu0
        %v908 = vadd.f32 0.0, %v907
        %909 = vmatmul.bf16.gmra.mxu0 %v676
        %v910 = vpop.f32.mrf.mxu0
        %v911 = vadd.f32 0.0, %v910
        %v912 = vpop.f32.mrf.mxu0
        %v913 = vadd.f32 0.0, %v912
        %914 = vmatmul.bf16.gmra.mxu0 %v677
        %v915 = vpop.f32.mrf.mxu0
        %v916 = vadd.f32 0.0, %v915
        %v917 = vpop.f32.mrf.mxu0
        %v918 = vadd.f32 0.0, %v917
        %919 = vmatmul.bf16.gmra.mxu0 %v678
        %v920 = vpop.f32.mrf.mxu0
        %v921 = vadd.f32 0.0, %v920
        %v922 = vpop.f32.mrf.mxu0
        %v923 = vadd.f32 0.0, %v922
        %924 = vmatmul.bf16.gmra.mxu0 %v679
        %v925 = vpop.f32.mrf.mxu0
        %v926 = vadd.f32 0.0, %v925
        %v927 = vpop.f32.mrf.mxu0
        %v928 = vadd.f32 0.0, %v927
        %929 = vmatmul.bf16.gmra.mxu0 %v680
        %v930 = vpop.f32.mrf.mxu0
        %v931 = vadd.f32 0.0, %v930
        %v932 = vpop.f32.mrf.mxu0
        %v933 = vadd.f32 0.0, %v932
        %934 = vmatmul.bf16.gmra.mxu0 %v681
        %v935 = vpop.f32.mrf.mxu0
        %v936 = vadd.f32 0.0, %v935
        %v937 = vpop.f32.mrf.mxu0
        %v938 = vadd.f32 0.0, %v937
        %939 = vmatmul.bf16.gmra.mxu0 %v682
        %v940 = vpop.f32.mrf.mxu0
        %v941 = vadd.f32 0.0, %v940
        %v942 = vpop.f32.mrf.mxu0
        %v943 = vadd.f32 0.0, %v942
        %944 = vmatmul.bf16.gmra.mxu0 %v683
        %v945 = vpop.f32.mrf.mxu0
        %v946 = vadd.f32 0.0, %v945
        %v947 = vpop.f32.mrf.mxu0
        %v948 = vadd.f32 0.0, %v947
        %949 = vmatmul.bf16.gmra.mxu0 %v684
        %v950 = vpop.f32.mrf.mxu0
        %v951 = vadd.f32 0.0, %v950
        %v952 = vpop.f32.mrf.mxu0
        %v953 = vadd.f32 0.0, %v952
        %954 = vmatmul.bf16.gmra.mxu0 %v685
        %v955 = vpop.f32.mrf.mxu0
        %v956 = vadd.f32 0.0, %v955
        %v957 = vpop.f32.mrf.mxu0
        %v958 = vadd.f32 0.0, %v957
        %959 = vdwg.mxu0
        %vm960 = vcmask 662528
        %961 = vst.msk [vmem:[%s265] sm:$0xff] %vm960, %v591
        %962 = vst.msk [vmem:[%s265 + $0x8] sm:$0xff] %vm960, %v593
        %963 = vst.msk [vmem:[%s265 + $0x10] sm:$0xff] %vm960, %v596
        %964 = vst.msk [vmem:[%s265 + $0x18] sm:$0xff] %vm960, %v598
        %965 = vst.msk [vmem:[%s265 + $0x20] sm:$0xff] %vm960, %v601
        %966 = vst.msk [vmem:[%s265 + $0x28] sm:$0xff] %vm960, %v603
        %967 = vst.msk [vmem:[%s265 + $0x30] sm:$0xff] %vm960, %v606
        %968 = vst.msk [vmem:[%s265 + $0x38] sm:$0xff] %vm960, %v608
        %969 = vst.msk [vmem:[%s265 + $0x40] sm:$0xff] %vm960, %v611
        %970 = vst.msk [vmem:[%s265 + $0x48] sm:$0xff] %vm960, %v613
        %971 = vst.msk [vmem:[%s265 + $0x50] sm:$0xff] %vm960, %v616
        %972 = vst.msk [vmem:[%s265 + $0x58] sm:$0xff] %vm960, %v618
        %973 = vst.msk [vmem:[%s265 + $0x60] sm:$0xff] %vm960, %v621
        %974 = vst.msk [vmem:[%s265 + $0x68] sm:$0xff] %vm960, %v623
        %975 = vst.msk [vmem:[%s265 + $0x70] sm:$0xff] %vm960, %v626
        %976 = vst.msk [vmem:[%s265 + $0x78] sm:$0xff] %vm960, %v628
        %977 = vst.msk [vmem:[%s265 + $0x80] sm:$0xff] %vm960, %v631
        %978 = vst.msk [vmem:[%s265 + $0x88] sm:$0xff] %vm960, %v633
        %979 = vst.msk [vmem:[%s265 + $0x90] sm:$0xff] %vm960, %v636
        %980 = vst.msk [vmem:[%s265 + $0x98] sm:$0xff] %vm960, %v638
        %981 = vst.msk [vmem:[%s265 + $0xa0] sm:$0xff] %vm960, %v641
        %982 = vst.msk [vmem:[%s265 + $0xa8] sm:$0xff] %vm960, %v643
        %983 = vst.msk [vmem:[%s265 + $0xb0] sm:$0xff] %vm960, %v646
        %984 = vst.msk [vmem:[%s265 + $0xb8] sm:$0xff] %vm960, %v648
        %985 = vst.msk [vmem:[%s265 + $0xc0] sm:$0xff] %vm960, %v651
        %986 = vst.msk [vmem:[%s265 + $0xc8] sm:$0xff] %vm960, %v653
        %987 = vst.msk [vmem:[%s265 + $0xd0] sm:$0xff] %vm960, %v656
        %988 = vst.msk [vmem:[%s265 + $0xd8] sm:$0xff] %vm960, %v658
        %989 = vst.msk [vmem:[%s265 + $0xe0] sm:$0xff] %vm960, %v661
        %990 = vst.msk [vmem:[%s265 + $0xe8] sm:$0xff] %vm960, %v663
        %991 = vst.msk [vmem:[%s265 + $0xf0] sm:$0xff] %vm960, %v666
        %992 = vst.msk [vmem:[%s265 + $0xf8] sm:$0xff] %vm960, %v668
        %993 = vst [vmem:[%s259] sm:$0xff] %v792
        %994 = vst [vmem:[%s259 + $0x8] sm:$0xff] %v881
        %995 = vst [vmem:[%s259 + $0x10] sm:$0xff] %v794
        %996 = vst [vmem:[%s259 + $0x18] sm:$0xff] %v883
        %997 = vst [vmem:[%s259 + $0x20] sm:$0xff] %v797
        %998 = vst [vmem:[%s259 + $0x28] sm:$0xff] %v886
        %999 = vst [vmem:[%s259 + $0x30] sm:$0xff] %v799
        %1000 = vst [vmem:[%s259 + $0x38] sm:$0xff] %v888
        %1001 = vst [vmem:[%s259 + $0x40] sm:$0xff] %v802
        %1002 = vst [vmem:[%s259 + $0x48] sm:$0xff] %v891
        %1003 = vst [vmem:[%s259 + $0x50] sm:$0xff] %v804
        %1004 = vst [vmem:[%s259 + $0x58] sm:$0xff] %v893
        %1005 = vst [vmem:[%s259 + $0x60] sm:$0xff] %v807
        %1006 = vst [vmem:[%s259 + $0x68] sm:$0xff] %v896
        %1007 = vst [vmem:[%s259 + $0x70] sm:$0xff] %v809
        %1008 = vst [vmem:[%s259 + $0x78] sm:$0xff] %v898
        %1009 = vst [vmem:[%s259 + $0x80] sm:$0xff] %v812
        %1010 = vst [vmem:[%s259 + $0x88] sm:$0xff] %v901
        %1011 = vst [vmem:[%s259 + $0x90] sm:$0xff] %v814
        %1012 = vst [vmem:[%s259 + $0x98] sm:$0xff] %v903
        %1013 = vst [vmem:[%s259 + $0xa0] sm:$0xff] %v817
        %1014 = vst [vmem:[%s259 + $0xa8] sm:$0xff] %v906
        %1015 = vst [vmem:[%s259 + $0xb0] sm:$0xff] %v819
        %1016 = vst [vmem:[%s259 + $0xb8] sm:$0xff] %v908
        %1017 = vst [vmem:[%s259 + $0xc0] sm:$0xff] %v822
        %1018 = vst [vmem:[%s259 + $0xc8] sm:$0xff] %v911
        %1019 = vst [vmem:[%s259 + $0xd0] sm:$0xff] %v824
        %1020 = vst [vmem:[%s259 + $0xd8] sm:$0xff] %v913
        %1021 = vst [vmem:[%s259 + $0xe0] sm:$0xff] %v827
        %1022 = vst [vmem:[%s259 + $0xe8] sm:$0xff] %v916
        %1023 = vst [vmem:[%s259 + $0xf0] sm:$0xff] %v829
        %1024 = vst [vmem:[%s259 + $0xf8] sm:$0xff] %v918
        %1025 = vst [vmem:[%s259 + $0x100] sm:$0xff] %v832
        %1026 = vst [vmem:[%s259 + $0x108] sm:$0xff] %v921
        %1027 = vst [vmem:[%s259 + $0x110] sm:$0xff] %v834
        %1028 = vst [vmem:[%s259 + $0x118] sm:$0xff] %v923
        %1029 = vst [vmem:[%s259 + $0x120] sm:$0xff] %v837
        %1030 = vst [vmem:[%s259 + $0x128] sm:$0xff] %v926
        %1031 = vst [vmem:[%s259 + $0x130] sm:$0xff] %v839
        %1032 = vst [vmem:[%s259 + $0x138] sm:$0xff] %v928
        %1033 = vst [vmem:[%s259 + $0x140] sm:$0xff] %v842
        %1034 = vst [vmem:[%s259 + $0x148] sm:$0xff] %v931
        %1035 = vst [vmem:[%s259 + $0x150] sm:$0xff] %v844
        %1036 = vst [vmem:[%s259 + $0x158] sm:$0xff] %v933
        %1037 = vst [vmem:[%s259 + $0x160] sm:$0xff] %v847
        %1038 = vst [vmem:[%s259 + $0x168] sm:$0xff] %v936
        %1039 = vst [vmem:[%s259 + $0x170] sm:$0xff] %v849
        %1040 = vst [vmem:[%s259 + $0x178] sm:$0xff] %v938
        %1041 = vst [vmem:[%s259 + $0x180] sm:$0xff] %v852
        %1042 = vst [vmem:[%s259 + $0x188] sm:$0xff] %v941
        %1043 = vst [vmem:[%s259 + $0x190] sm:$0xff] %v854
        %1044 = vst [vmem:[%s259 + $0x198] sm:$0xff] %v943
        %1045 = vst [vmem:[%s259 + $0x1a0] sm:$0xff] %v857
        %1046 = vst [vmem:[%s259 + $0x1a8] sm:$0xff] %v946
        %1047 = vst [vmem:[%s259 + $0x1b0] sm:$0xff] %v859
        %1048 = vst [vmem:[%s259 + $0x1b8] sm:$0xff] %v948
        %1049 = vst [vmem:[%s259 + $0x1c0] sm:$0xff] %v862
        %1050 = vst [vmem:[%s259 + $0x1c8] sm:$0xff] %v951
        %1051 = vst [vmem:[%s259 + $0x1d0] sm:$0xff] %v864
        %1052 = vst [vmem:[%s259 + $0x1d8] sm:$0xff] %v953
        %1053 = vst [vmem:[%s259 + $0x1e0] sm:$0xff] %v867
        %1054 = vst [vmem:[%s259 + $0x1e8] sm:$0xff] %v956
        %1055 = vst [vmem:[%s259 + $0x1f0] sm:$0xff] %v869
        %1056 = vst [vmem:[%s259 + $0x1f8] sm:$0xff] %v958
        %s1057 = smul.u32 32, %s23
        %p1058 = scmp.lt.s32.totalorder %s1057, 127
        %s1059 = scalar_select %p1058, %s1057, 127
        %s1060 = smul.addr %s1059, 8
        %s1061 = scalar_lea.vmem %s3, %s1060
        %s1062 = sand.u32 %s125, 1
        %s1063 = scalar_lea.sflag [#allocation4], %s1062
        %s1064 = sand.u32 %s125, 1
        %s1065 = smul.addr %s1064, 512
        %s1066 = scalar_lea.vmem [#allocation8], %s1065
        // Predicated region
        $region45: #{ae_forward.1} parent=31 // pred_check
          %p1067 = pneg %p109
        $region46: #{ae_forward.1} parent=31 // pred_check_branch
          %1069 = sbr.rel (%p1067) target = $region48
        $region47: #{ae_forward.1} parent=31 // pred_region
          %s1070 = smul.u32 32, %s23
        $region48: #{ae_forward.1} parent=31 // pred_fallthru
          _
        // Predicated region
        $region49: #{ae_forward.1} parent=31 // pred_check
          %p1071 = pneg %p135
        $region50: #{ae_forward.1} parent=31 // pred_check_branch
          %1073 = sbr.rel (%p1071) target = $region52
        $region51: #{ae_forward.1} parent=31 // pred_region
          %s1074 = smul.u32 32, %s23
          %1076 = vsyncadd %s1063, 0
          %s1077 = smul.addr %s1074, 2
          %s1078 = smul.addr %s1077, 8
          %s1079 = scalar_lea.hbm %s4, %s1078
          %s1080 = sshll.u32 %s1066, 4
          %s1081 = int_to_ptr.vmem [resolvable:$true] %s1080
          %s1082 = sshll.u32 %s1079, 4
          %s1083 = int_to_ptr.hbm [resolvable:$true] %s1082
          %1088 = dma.vmem_to_hbm [thread:$0]  %s1081, 8192, %s1083, %s1063, 256, 256, 16
        $region52: #{ae_forward.1} parent=31 // pred_fallthru
          _
      $region32: #{ae_forward.1} parent=5 // pred_fallthru
        _
      %p1089 = scmp.le.s32.totalorder 2, %s18
      // Predicated region
      $region53: #{ae_forward.1} parent=5 // pred_check
        %p1090 = pneg %p1089
      $region54: #{ae_forward.1} parent=5 // pred_check_branch
        %1092 = sbr.rel (%p1090) target = $region56
      $region55: #{ae_forward.1} parent=5 // pred_region
        %s1093 = ssub.s32 %s18, 2
        // Predicated region
        $region57: #{ae_forward.1} parent=55 // pred_check
          %p1094 = pneg %p115
        $region58: #{ae_forward.1} parent=55 // pred_check_branch
          %1096 = sbr.rel (%p1094) target = $region60
        $region59: #{ae_forward.1} parent=55 // pred_region
          %s1097 = smul.u32 32, %s24
          %p1098 = scmp.lt.s32.totalorder %s1097, 127
          %s1099 = scalar_select %p1098, %s1097, 127
          %s1100 = smul.addr %s1099, 8
          %s1101 = scalar_lea.vmem %s3, %s1100
        $region60: #{ae_forward.1} parent=55 // pred_fallthru
          _
        // Predicated region
        $region61: #{ae_forward.1} parent=55 // pred_check
          %p1102 = pneg %p141
        $region62: #{ae_forward.1} parent=55 // pred_check_branch
          %1104 = sbr.rel (%p1102) target = $region64
        $region63: #{ae_forward.1} parent=55 // pred_region
          %s1105 = sand.u32 %s126, 1
          %s1106 = scalar_lea.sflag [#allocation4], %s1105
          %s1107 = sand.u32 %s126, 1
          %s1108 = smul.addr %s1107, 512
          %s1109 = scalar_lea.vmem [#allocation8], %s1108
          %1111 = dma.done %s1106, 8192
        $region64: #{ae_forward.1} parent=55 // pred_fallthru
          _
      $region56: #{ae_forward.1} parent=5 // pred_fallthru
        _
    $region6: #{ae_forward.1} parent=1 // loop_footer
      %s22 = sadd.s32 1, %s18
    $region7: #{ae_forward.1} parent=1 // loop_footer_branch
      %17 = sbr.rel target = $region3
    $region8: #{ae_forward.1} parent=1 // loop_exit
      _
    %1112 = vsyncpa [#allocation3], 1
    %s1113 = scalar_lea.sflag [#allocation3], 1
    %1114 = vsyncpa %s1113, 1
    %1115 = vsyncpa [#allocation6], 1
    %1116 = vsyncpa [#allocation4], 1
    %s1117 = scalar_lea.sflag [#allocation4], 1
    %1118 = vsyncpa %s1117, 1

</llo_original>
